<compile_context>
chip_gen: v7x
topology: tpu7x:2x2x1
jax: 0.10.0
libtpu: 0.0.40
codegen_flags: <defaults>
</compile_context>

<pallas_src>
import functools

import jax
import jax.numpy as jnp
from jax.experimental import pallas as pl
from jax.experimental.pallas import tpu as pltpu


def _round_up(x: int, m: int) -> int:
    return ((x + m - 1) // m) * m


# ---------------------------------------------------------------------------
# Kernel: one row-tile of the Gate forward (fused two-head matmul)
# ---------------------------------------------------------------------------
def gate_kernel(x_ent_ref, x_lit_ref, w_ent_ref, w_lit_ref, b_ref, out_ref, *, d):
    """
    x_ent_ref: (tm, D)   entity-embedding row tile (f32)
    x_lit_ref: (tm, L)   literal-feature row tile (f32)
    w_ent_ref: (D, 2D)   [ g.weight_ent^T | g1.weight^T ]  (bf16, VMEM-resident)
    w_lit_ref: (L, 2D)   [ g.weight_lit^T | g2.weight^T ]  (bf16, VMEM-resident)
    b_ref:     (1, 2D)   [ g.bias | gate_bias ]            (f32)
    out_ref:   (tm, D)
    """
    x_ent = x_ent_ref[...]  # f32, also used in the blend epilogue

    # One fused (tm, 2D) pre-activation: bf16 into the MXU, f32 accumulation.
    y = (
        jnp.dot(x_ent.astype(jnp.bfloat16), w_ent_ref[...],
                preferred_element_type=jnp.float32)
        + jnp.dot(x_lit_ref[...].astype(jnp.bfloat16), w_lit_ref[...],
                  preferred_element_type=jnp.float32)
        + b_ref[...]
    )

    g_embedded = jnp.tanh(y[:, :d])
    gate = jax.nn.sigmoid(y[:, d:])
    out_ref[...] = (1.0 - gate) * x_ent + gate * g_embedded


# ---------------------------------------------------------------------------
# Wrapper: row-tiled pallas_call, resident weights, no concat / no pad
# ---------------------------------------------------------------------------
@functools.partial(jax.jit, static_argnames=("tile_rows",))
def gate_forward(x_ent, x_lit, w_ent, w_lit, bias, *, tile_rows=2048):
    """Gate forward. x_ent: (N, D), x_lit: (N, L). Returns (N, D) float32."""
    N, D = x_ent.shape
    L = x_lit.shape[1]

    # Row tile: multiple of 8 (f32 sublane).  Cap at ~N/2 so the parallel row
    # axis has >=2 grid steps when N is non-trivial (v7x megacore sharding);
    # ragged last blocks are handled by Pallas edge masking (no pad copy).
    tm = min(_round_up(tile_rows, 8), _round_up(pl.cdiv(N, 2), 8))
    tm = max(tm, 8)
    grid = (pl.cdiv(N, tm),)

    # Weights are tiny ((D+L) x 2D); one-off bf16 cast, kept VMEM-resident.
    w_ent_bf = w_ent.astype(jnp.bfloat16)
    w_lit_bf = w_lit.astype(jnp.bfloat16)
    bias_f32 = bias.astype(jnp.float32)

    out = pl.pallas_call(
        functools.partial(gate_kernel, d=D),
        out_shape=jax.ShapeDtypeStruct((N, D), jnp.float32),
        grid_spec=pltpu.PrefetchScalarGridSpec(
            num_scalar_prefetch=0,
            grid=grid,
            in_specs=[
                pl.BlockSpec((tm, D), lambda i: (i, 0)),      # x_ent tile (streamed)
                pl.BlockSpec((tm, L), lambda i: (i, 0)),      # x_lit tile (streamed)
                pl.BlockSpec((D, 2 * D), lambda i: (0, 0)),   # W_ent  (resident)
                pl.BlockSpec((L, 2 * D), lambda i: (0, 0)),   # W_lit  (resident)
                pl.BlockSpec((1, 2 * D), lambda i: (0, 0)),   # [bg | gate_bias]
            ],
            out_specs=pl.BlockSpec((tm, D), lambda i: (i, 0)),
        ),
        compiler_params=pltpu.CompilerParams(
            dimension_semantics=("parallel",)),
    )(x_ent.astype(jnp.float32), x_lit.astype(jnp.float32),
      w_ent_bf, w_lit_bf, bias_f32)

    return out


# ---------------------------------------------------------------------------
# Pure-JAX f32 reference (numerical sanity check)
# ---------------------------------------------------------------------------
def gate_ref(x_ent, x_lit, w_ent, w_lit, bias):
    d = x_ent.shape[1]
    y = x_ent @ w_ent + x_lit @ w_lit + bias
    g_embedded = jnp.tanh(y[:, :d])
    gate = jax.nn.sigmoid(y[:, d:])
    return (1.0 - gate) * x_ent + gate * g_embedded


# ---------------------------------------------------------------------------
# Deterministic parameter construction (PyTorch-layout weights -> packed)
# ---------------------------------------------------------------------------
def init_gate_params(key, input_size, output_size, scale=0.1):
    """Returns (w_ent (D,2D), w_lit (L,2D), bias (1,2D)), all float32."""
    D, L = output_size, input_size - output_size
    k_g, k_bg, k_g1, k_g2 = jax.random.split(key, 4)
    # PyTorch layouts: g.weight (D, D+L), g.bias (D,), g1.weight (D, D),
    # g2.weight (D, L), gate_bias zeros(D).
    wg = scale * jax.random.normal(k_g, (D, input_size), jnp.float32)
    bg = scale * jax.random.normal(k_bg, (D,), jnp.float32)
    w1 = scale * jax.random.normal(k_g1, (D, D), jnp.float32)
    w2 = scale * jax.random.normal(k_g2, (D, L), jnp.float32)
    gate_bias = jnp.zeros((D,), jnp.float32)

    wg_t = wg.T                      # (D+L, D)
    w_ent = jnp.concatenate([wg_t[:D], w1.T], axis=1)   # (D, 2D)
    w_lit = jnp.concatenate([wg_t[D:], w2.T], axis=1)   # (L, 2D)
    bias = jnp.concatenate([bg, gate_bias])[None, :]     # (1, 2D)
    return w_ent, w_lit, bias


if __name__ == "__main__":
    OUTPUT_SIZE = 32            # D (entity embedding dim)
    N_LIT = 8                   # L (literal feature dim)
    INPUT_SIZE = OUTPUT_SIZE + N_LIT
    BATCH = 8

    key = jax.random.PRNGKey(0)
    kp, ka, kb, kc, kd = jax.random.split(key, 5)
    params = init_gate_params(kp, INPUT_SIZE, OUTPUT_SIZE)

    # Small batch call (typical Gate usage on query entities): grid == 1 step.
    x_ent = jax.random.normal(ka, (BATCH, OUTPUT_SIZE), jnp.float32)
    x_lit = jax.random.uniform(kb, (BATCH, N_LIT), jnp.float32)
    out = jax.block_until_ready(gate_forward(x_ent, x_lit, *params))
    ref = gate_ref(x_ent, x_lit, *params)
    assert out.shape == (BATCH, OUTPUT_SIZE)
    # bf16 MXU operands vs f32 reference -> looser tolerance.
    assert jnp.allclose(out, ref, atol=3e-2, rtol=3e-2), \
        float(jnp.max(jnp.abs(out - ref)))

    # Larger, non-tile-multiple row count: exercises the row grid plus the
    # ragged (masked) edge block — no pad copy anywhere.
    N2 = 200
    x_ent2 = jax.random.normal(kc, (N2, OUTPUT_SIZE), jnp.float32)
    x_lit2 = jax.random.uniform(kd, (N2, N_LIT), jnp.float32)
    out2 = jax.block_until_ready(
        gate_forward(x_ent2, x_lit2, *params, tile_rows=64))
    ref2 = gate_ref(x_ent2, x_lit2, *params)
    assert out2.shape == (N2, OUTPUT_SIZE)
    assert jnp.allclose(out2, ref2, atol=3e-2, rtol=3e-2), \
        float(jnp.max(jnp.abs(out2 - ref2)))

    print("KERNEL_OK")
</pallas_src>

<mosaic_0001>
module attributes {stable_mosaic.version = 11 : i64} {
  func.func @gate_kernel(%arg0: i32, %arg1: memref<8x32xf32, #tpu.memory_space<vmem>>, %arg2: memref<8x8xf32, #tpu.memory_space<vmem>>, %arg3: memref<32x64xbf16, #tpu.memory_space<vmem>>, %arg4: memref<8x64xbf16, #tpu.memory_space<vmem>>, %arg5: memref<1x64xf32, #tpu.memory_space<vmem>>, %arg6: memref<8x32xf32, #tpu.memory_space<vmem>>) attributes {dimension_semantics = [#tpu.dimension_semantics<parallel>], iteration_bounds = array<i64: 1>, scalar_prefetch = 0 : i64, scratch_operands = 0 : i64, tpu.core_type = #tpu.core_type<tc>, window_params = [{transform_indices = @transform_0, window_bounds = array<i64: 8, 32>}, {transform_indices = @transform_1, window_bounds = array<i64: 8, 8>}, {pipeline_mode = #tpu.pipeline_mode<synchronous>, transform_indices = @transform_2, window_bounds = array<i64: 32, 64>}, {pipeline_mode = #tpu.pipeline_mode<synchronous>, transform_indices = @transform_3, window_bounds = array<i64: 8, 64>}, {pipeline_mode = #tpu.pipeline_mode<synchronous>, transform_indices = @transform_4, window_bounds = array<i64: 1, 64>}, {transform_indices = @transform_5, window_bounds = array<i64: 8, 32>}]} {
    %c0 = arith.constant 0 : index
    %c0_0 = arith.constant 0 : index
    %0 = vector.load %arg1[%c0, %c0_0] : memref<8x32xf32, #tpu.memory_space<vmem>>, vector<8x32xf32>
    %1 = arith.truncf %0 : vector<8x32xf32> to vector<8x32xbf16>
    %c0_1 = arith.constant 0 : index
    %c0_2 = arith.constant 0 : index
    %2 = vector.load %arg3[%c0_1, %c0_2] : memref<32x64xbf16, #tpu.memory_space<vmem>>, vector<32x64xbf16>
    %cst = arith.constant dense<0.000000e+00> : vector<8x64xf32>
    %3 = tpu.matmul %1, %2, %cst {dimension_numbers = #tpu.dot_dimension_numbers<[1], [0], [0], [1], [0, 0, 1, 1], [], []>} : vector<8x32xbf16>, vector<32x64xbf16>, vector<8x64xf32> -> vector<8x64xf32>
    %c0_3 = arith.constant 0 : index
    %c0_4 = arith.constant 0 : index
    %4 = vector.load %arg2[%c0_3, %c0_4] : memref<8x8xf32, #tpu.memory_space<vmem>>, vector<8x8xf32>
    %5 = arith.truncf %4 : vector<8x8xf32> to vector<8x8xbf16>
    %c0_5 = arith.constant 0 : index
    %c0_6 = arith.constant 0 : index
    %6 = vector.load %arg4[%c0_5, %c0_6] : memref<8x64xbf16, #tpu.memory_space<vmem>>, vector<8x64xbf16>
    %cst_7 = arith.constant dense<0.000000e+00> : vector<8x64xf32>
    %7 = tpu.matmul %5, %6, %cst_7 {dimension_numbers = #tpu.dot_dimension_numbers<[1], [0], [0], [1], [0, 0, 1, 1], [], []>} : vector<8x8xbf16>, vector<8x64xbf16>, vector<8x64xf32> -> vector<8x64xf32>
    %8 = arith.addf %3, %7 : vector<8x64xf32>
    %c0_8 = arith.constant 0 : index
    %c0_9 = arith.constant 0 : index
    %9 = vector.load %arg5[%c0_8, %c0_9] : memref<1x64xf32, #tpu.memory_space<vmem>>, vector<1x64xf32>
    %10 = vector.broadcast %9 : vector<1x64xf32> to vector<8x64xf32>
    %11 = arith.addf %8, %10 : vector<8x64xf32>
    %12 = vector.extract_strided_slice %11 {offsets = [0, 0], sizes = [8, 32], strides = [1, 1]} : vector<8x64xf32> to vector<8x32xf32>
    %13 = math.tanh %12 : vector<8x32xf32>
    %14 = vector.extract_strided_slice %11 {offsets = [0, 32], sizes = [8, 32], strides = [1, 1]} : vector<8x64xf32> to vector<8x32xf32>
    %15 = arith.negf %14 : vector<8x32xf32>
    %16 = math.exp %15 : vector<8x32xf32>
    %cst_10 = arith.constant 1.000000e+00 : f32
    %17 = vector.broadcast %cst_10 : f32 to vector<8x32xf32>
    %18 = arith.addf %17, %16 : vector<8x32xf32>
    %19 = arith.divf %17, %18 : vector<8x32xf32>
    %cst_11 = arith.constant 1.000000e+00 : f32
    %20 = vector.broadcast %cst_11 : f32 to vector<8x32xf32>
    %21 = arith.subf %20, %19 : vector<8x32xf32>
    %22 = arith.mulf %21, %0 : vector<8x32xf32>
    %23 = arith.mulf %19, %13 : vector<8x32xf32>
    %24 = arith.addf %22, %23 : vector<8x32xf32>
    %c0_12 = arith.constant 0 : index
    %c0_13 = arith.constant 0 : index
    %25 = vector.load %arg6[%c0_12, %c0_13] : memref<8x32xf32, #tpu.memory_space<vmem>>, vector<8x32xf32>
    tpu.vector_store %arg6[%c0_12, %c0_13], %24 {strides = array<i32>} : memref<8x32xf32, #tpu.memory_space<vmem>>, vector<8x32xf32>,
    return
  }
  func.func @transform_0(%arg0: i32) -> (i32, i32) {
    %c0_i32 = arith.constant 0 : i32
    %c0_i32_0 = arith.constant 0 : i32
    return %arg0, %c0_i32 : i32, i32
  }
  func.func @transform_1(%arg0: i32) -> (i32, i32) {
    %c0_i32 = arith.constant 0 : i32
    %c0_i32_0 = arith.constant 0 : i32
    return %arg0, %c0_i32 : i32, i32
  }
  func.func @transform_2(%arg0: i32) -> (i32, i32) {
    %c0_i32 = arith.constant 0 : i32
    %c0_i32_0 = arith.constant 0 : i32
    %c0_i32_1 = arith.constant 0 : i32
    return %c0_i32, %c0_i32_0 : i32, i32
  }
  func.func @transform_3(%arg0: i32) -> (i32, i32) {
    %c0_i32 = arith.constant 0 : i32
    %c0_i32_0 = arith.constant 0 : i32
    %c0_i32_1 = arith.constant 0 : i32
    return %c0_i32, %c0_i32_0 : i32, i32
  }
  func.func @transform_4(%arg0: i32) -> (i32, i32) {
    %c0_i32 = arith.constant 0 : i32
    %c0_i32_0 = arith.constant 0 : i32
    %c0_i32_1 = arith.constant 0 : i32
    return %c0_i32, %c0_i32_0 : i32, i32
  }
  func.func @transform_5(%arg0: i32) -> (i32, i32) {
    %c0_i32 = arith.constant 0 : i32
    %c0_i32_0 = arith.constant 0 : i32
    return %arg0, %c0_i32 : i32, i32
  }
}

</mosaic_0001>

<llo_original>
// kernel: gate_forward.1
$region0: #{gate_forward.1}
  #allocation0 [shape = 'u32[]', space=smem, size = 0x4, offset = 0x4, fixed_abs, tag = 'smem constant byte address 0x4 - core index']
  #allocation1 [shape = 'u32[144,128]{1,0:T(1,128)}', space=vmem, size = 0x12000, scoped, tag = 'internal scratch']
  %s0 = inlined_call_operand.vmem [shape: f32[8,32], index: 0, kind: input, shape index: {}]
  %s1 = inlined_call_operand.vmem [shape: f32[8,8], index: 1, kind: input, shape index: {}]
  %s2 = inlined_call_operand.vmem [shape: bf16[32,64], index: 2, kind: input, shape index: {}]
  %s3 = inlined_call_operand.vmem [shape: bf16[8,64], index: 3, kind: input, shape index: {}]
  %s4 = inlined_call_operand.vmem [shape: f32[1,64], index: 4, kind: input, shape index: {}]
  %s5 = inlined_call_operand.hbm [shape: f32[8,32], index: 5, kind: output, shape index: {}]
  %s6 = sld [smem:[#allocation0]]
  $region30: #{gate_forward.1} parent=0
    _
  %s8 = ssub.s32 1, %s6
  %s9 = scalar_select 0, %s8, %s6
  $region1: #{gate_forward.1} parent=0
    #allocation2 [shape = 'u8[4096]{0}', space=vmem, size = 0x1000, scoped, tag = 'output window, operand 0, single buffered']
    #allocation3 [shape = 's32[1]{0}', space=sflag, size = 0x4, scoped, tag = 'scoped memory for gate_forward.1']
    %10 = vsyncpa [#allocation3], 0
    // Predicated region
    $region2: #{gate_forward.1} parent=1 // pred_check
      _
    $region3: #{gate_forward.1} parent=1 // pred_check_branch
      %12 = sbr.rel (0) target = $region5
    $region4: #{gate_forward.1} parent=1 // pred_region
      _
    $region5: #{gate_forward.1} parent=1 // pred_fallthru
      _
    // Predicated region
    $region6: #{gate_forward.1} parent=1 // pred_check
      _
    $region7: #{gate_forward.1} parent=1 // pred_check_branch
      %14 = sbr.rel (0) target = $region9
    $region8: #{gate_forward.1} parent=1 // pred_region
      _
    $region9: #{gate_forward.1} parent=1 // pred_fallthru
      _
    // Predicated region
    $region10: #{gate_forward.1} parent=1 // pred_check
      _
    $region11: #{gate_forward.1} parent=1 // pred_check_branch
      %16 = sbr.rel (0) target = $region13
    $region12: #{gate_forward.1} parent=1 // pred_region
      _
    $region13: #{gate_forward.1} parent=1 // pred_fallthru
      _
    // Predicated region
    $region14: #{gate_forward.1} parent=1 // pred_check
      _
    $region15: #{gate_forward.1} parent=1 // pred_check_branch
      %18 = sbr.rel (0) target = $region17
    $region16: #{gate_forward.1} parent=1 // pred_region
      _
    $region17: #{gate_forward.1} parent=1 // pred_fallthru
      _
    // Predicated region
    $region18: #{gate_forward.1} parent=1 // pred_check
      _
    $region19: #{gate_forward.1} parent=1 // pred_check_branch
      %20 = sbr.rel (0) target = $region21
    $region20: #{gate_forward.1} parent=1 // pred_region
      _
    $region21: #{gate_forward.1} parent=1 // pred_fallthru
      _
    %v22 = vld [vmem:[%s0] sm:$0xff]
    %v23 = vpack.c.bf16 %v22, %v22
    %v24 = vld [vmem:[%s2] sm:$0xf]
    %v25 = vld [vmem:[%s2 + $0x4] sm:$0xf]
    %v26 = vld [vmem:[%s2 + $0x8] sm:$0xf]
    %v27 = vld [vmem:[%s2 + $0xc] sm:$0xf]
    %v28 = vld [vmem:[%s1] sm:$0xff]
    %v29 = vpack.c.bf16 %v28, %v28
    %v30 = vld [vmem:[%s3] sm:$0xf]
    %vm31 = vcmask 64512
    %v33 = vsel %vm31, %v29, 0
    %vm35 = vcmask 1043456
    %v37 = vsel %vm35, %v30, 0
    %39 = vmatprep.subr.bf16.mxu0 0
    %40 = vmatpush1.bf16.msra.mxu0 %v37
    %41 = vmatprep.subr.bf16.mxu0 0
    %42 = vmatpush1.bf16.msra.mxu0 0
    %43 = vmatprep.subr.bf16.mxu0 0
    %44 = vmatpush1.bf16.msra.mxu0 0
    %45 = vmatprep.subr.bf16.mxu0 0
    %46 = vmatpush1.bf16.msra.mxu0 0
    %47 = vmatprep.subr.bf16.mxu0 0
    %48 = vmatpush1.bf16.msra.mxu0 0
    %49 = vmatprep.subr.bf16.mxu0 0
    %50 = vmatpush1.bf16.msra.mxu0 0
    %51 = vmatprep.subr.bf16.mxu0 0
    %52 = vmatpush1.bf16.msra.mxu0 0
    %53 = vmatprep.subr.bf16.mxu0 0
    %54 = vmatpush1.bf16.msra.mxu0 0
    %55 = vmatprep.subr.bf16.mxu0 0
    %56 = vmatpush1.bf16.msra.mxu0 0
    %57 = vmatprep.subr.bf16.mxu0 0
    %58 = vmatpush1.bf16.msra.mxu0 0
    %59 = vmatprep.subr.bf16.mxu0 0
    %60 = vmatpush1.bf16.msra.mxu0 0
    %61 = vmatprep.subr.bf16.mxu0 0
    %62 = vmatpush1.bf16.msra.mxu0 0
    %63 = vmatprep.subr.bf16.mxu0 0
    %64 = vmatpush1.bf16.msra.mxu0 0
    %65 = vmatprep.subr.bf16.mxu0 0
    %66 = vmatpush1.bf16.msra.mxu0 0
    %67 = vmatprep.subr.bf16.mxu0 0
    %68 = vmatpush1.bf16.msra.mxu0 0
    %69 = vmatprep.subr.bf16.mxu0 0
    %70 = vmatpush1.bf16.msra.mxu0 0
    %71 = vmatprep.mubr.bf16.mxu0 0
    %72 = vmatmul.mubr.bf16.gmra.mrb[0].mxu0 %v33
    %v73 = vpop.f32.mrb[0].mxu0
    %v74 = vadd.f32 0.0, %v73
    %v75 = vpop.f32.mrb[0].mxu0
    %v76 = vpop.f32.mrb[0].mxu0
    %v77 = vpop.f32.mrb[0].mxu0
    %78 = vdwg.mxu0
    %v83 = vunpack.c.l.b16 %v24
    %v84 = vunpack.c.l.b16 %v25
    %v85 = vunpack.c.l.b16 %v26
    %v86 = vunpack.c.l.b16 %v27
    %v87 = vpack.c.b16 %v84, %v83
    %v88 = vpack.c.b16 %v86, %v85
    %vm91 = vcmask 261120
    %v93 = vsel %vm91, %v23, 0
    %95 = vmatprep.subr.bf16.mxu0 0
    %96 = vmatpush1.bf16.msra.mxu0 %v87
    %97 = vmatprep.subr.bf16.mxu0 0
    %98 = vmatpush1.bf16.msra.mxu0 %v88
    %99 = vmatprep.subr.bf16.mxu0 0
    %100 = vmatpush1.bf16.msra.mxu0 0
    %101 = vmatprep.subr.bf16.mxu0 0
    %102 = vmatpush1.bf16.msra.mxu0 0
    %103 = vmatprep.subr.bf16.mxu0 0
    %104 = vmatpush1.bf16.msra.mxu0 0
    %105 = vmatprep.subr.bf16.mxu0 0
    %106 = vmatpush1.bf16.msra.mxu0 0
    %107 = vmatprep.subr.bf16.mxu0 0
    %108 = vmatpush1.bf16.msra.mxu0 0
    %109 = vmatprep.subr.bf16.mxu0 0
    %110 = vmatpush1.bf16.msra.mxu0 0
    %111 = vmatprep.subr.bf16.mxu0 0
    %112 = vmatpush1.bf16.msra.mxu0 0
    %113 = vmatprep.subr.bf16.mxu0 0
    %114 = vmatpush1.bf16.msra.mxu0 0
    %115 = vmatprep.subr.bf16.mxu0 0
    %116 = vmatpush1.bf16.msra.mxu0 0
    %117 = vmatprep.subr.bf16.mxu0 0
    %118 = vmatpush1.bf16.msra.mxu0 0
    %119 = vmatprep.subr.bf16.mxu0 0
    %120 = vmatpush1.bf16.msra.mxu0 0
    %121 = vmatprep.subr.bf16.mxu0 0
    %122 = vmatpush1.bf16.msra.mxu0 0
    %123 = vmatprep.subr.bf16.mxu0 0
    %124 = vmatpush1.bf16.msra.mxu0 0
    %125 = vmatprep.subr.bf16.mxu0 0
    %126 = vmatpush1.bf16.msra.mxu0 0
    %127 = vmatprep.mubr.bf16.mxu0 0
    %128 = vmatmul.mubr.bf16.gmra.mrb[0].mxu0 %v93
    %v129 = vpop.f32.mrb[0].mxu0
    %v130 = vadd.f32 %v74, %v129
    %v131 = vpop.f32.mrb[0].mxu0
    %v132 = vpop.f32.mrb[0].mxu0
    %v133 = vpop.f32.mrb[0].mxu0
    %134 = vdwg.mxu0
    %v135 = vld [vmem:[%s4] sm:$0x1]
    %v137 = vlaneseq
    %v138 = vshrl.u32 %v137, 7
    %v139 = vsub.s32 0, %v138
    %v140 = vrot.slane %v135, %v139
    %v142 = vadd.f32 %v130, %v140
    %v143 = vtanh.pop %v142
    %v144 = vxor.u32 %v142, 2147483648
    %v145 = vmul.f32 %v144, 1.442695
    %v146 = vpow.pop %v145
    %v147 = vadd.f32 %v146, 1.0
    %v148 = vrcp.pop %v147
    %v149 = vmul.f32 1.0, %v148
    %v150 = vsub.f32 1.0, %v149
    %152 = vrot.lane.b32.xlu0 %v22, 32
    %v153 = vpop.permute.xlu0 %152
    %v155 = vmul.f32 %v150, %v153
    %157 = vrot.lane.b32.xlu0 %v143, 32
    %v158 = vpop.permute.xlu0 %157
    %v160 = vmul.f32 %v149, %v158
    %v161 = vadd.f32 %v155, %v160
    %163 = vrot.lane.b32.xlu0 %v161, 96
    %v164 = vpop.permute.xlu0 %163
    %166 = vst.msk [vmem:[#allocation2] sm:$0xff] %vm91, %v164
    // Predicated region
    $region22: #{gate_forward.1} parent=1 // pred_check
      _
    $region23: #{gate_forward.1} parent=1 // pred_check_branch
      %168 = sbr.rel (0) target = $region25
    $region24: #{gate_forward.1} parent=1 // pred_region
      %s170 = ssub.s32 128, 128
      %171 = vsyncadd [#allocation3], %s170
      %s173 = sshll.u32 [#allocation2], 4
      %s174 = int_to_ptr.vmem [resolvable:$true] %s173
      %176 = dma.vmem_to_hbm [thread:$0]  %s174, 128, %s5, [#allocation3]
    $region25: #{gate_forward.1} parent=1 // pred_fallthru
      _
    // Predicated region
    $region26: #{gate_forward.1} parent=1 // pred_check
      _
    $region27: #{gate_forward.1} parent=1 // pred_check_branch
      %178 = sbr.rel (0) target = $region29
    $region28: #{gate_forward.1} parent=1 // pred_region
      %179 = dma.done [#allocation3], 128
    $region29: #{gate_forward.1} parent=1 // pred_fallthru
      _
    %180 = vsyncpa [#allocation3], 1

</llo_original>
